<compile_context>
chip_gen: v5e
topology: v5e:2x2
jax: 0.10.0
libtpu: 0.0.40
codegen_flags: <defaults>
</compile_context>

<pallas_src>
import jax
import jax.numpy as jnp
from jax.experimental import pallas as pl
from jax.experimental.pallas import tpu as pltpu

HIDDEN = 50


def _round_up(x: int, m: int) -> int:
    return (x + m - 1) // m * m


def mlp_kernel(x_ref, w1_ref, b1_ref, w2_ref, b2_ref, o_ref):
    # FC1 + ReLU.  f32 end-to-end, accumulate in f32 on the MXU.
    h = jnp.dot(x_ref[...], w1_ref[...], preferred_element_type=jnp.float32)
    h = jnp.maximum(h + b1_ref[...], 0.0)            # [TB, H] + [1, H]
    # FC2 + bias, store the narrow [TB, A] tile directly.
    q = jnp.dot(h, w2_ref[...], preferred_element_type=jnp.float32)
    o_ref[...] = (q + b2_ref[...]).astype(o_ref.dtype)


def prepare_mlp_params(w1, b1, w2, b2):
    """One-time parameter prep, hoisted out of the forward path.

    Casts to f32 and reshapes biases to 2-D row vectors so every operand
    presents a >= 2-D tile to the kernel.  No zero-padding needed.
    """
    f32 = jnp.float32
    return (w1.astype(f32),
            b1.astype(f32).reshape(1, -1),
            w2.astype(f32),
            b2.astype(f32).reshape(1, -1))


def _pick_tile_b(B: int) -> int:
    if B <= 8:
        return B                       # single full-dim block, no edge masking
    cap = 2048                         # amortize per-step overhead for big B
    at_least_two = _round_up(pl.cdiv(B, 2), 8)   # >= 2 grid steps (v7x megacore)
    return max(8, min(cap, at_least_two))


def mlp_forward(state, params, *, tile_b=None):
    """state: [B, input_size] f32, params from prepare_mlp_params
    -> q_values: [B, num_of_actions] f32."""
    w1, b1, w2, b2 = params
    B, K = state.shape
    Kw, H = w1.shape
    Hw, A = w2.shape
    assert K == Kw and H == Hw and b1.shape == (1, H) and b2.shape == (1, A)

    if tile_b is None:
        tile_b = _pick_tile_b(B)

    grid = (pl.cdiv(B, tile_b),)

    # True (unpadded) cost so XLA doesn't treat the call as 42x more expensive.
    flops = 2 * B * (K * H + H * A)
    bytes_accessed = 4 * (B * K + K * H + H + H * A + A + B * A)

    return pl.pallas_call(
        mlp_kernel,
        out_shape=jax.ShapeDtypeStruct((B, A), state.dtype),
        grid_spec=pltpu.PrefetchScalarGridSpec(
            num_scalar_prefetch=0,
            grid=grid,
            in_specs=[
                # state tile streams along the batch grid axis (last dim = K,
                # equal to the full array dim -> legal without padding).
                pl.BlockSpec((tile_b, K), lambda i: (i, 0)),
                # weights / biases: full-array blocks, constant block index
                # -> DMA'd once, resident in VMEM across all grid steps.
                pl.BlockSpec((K, H), lambda i: (0, 0)),
                pl.BlockSpec((1, H), lambda i: (0, 0)),
                pl.BlockSpec((H, A), lambda i: (0, 0)),
                pl.BlockSpec((1, A), lambda i: (0, 0)),
            ],
            out_specs=pl.BlockSpec((tile_b, A), lambda i: (i, 0)),
        ),
        compiler_params=pltpu.CompilerParams(
            dimension_semantics=("parallel",),   # batch tiles independent (2 TCs on v7x)
        ),
        cost_estimate=pl.CostEstimate(
            flops=flops, transcendentals=0, bytes_accessed=bytes_accessed),
    )(state, w1, b1, w2, b2)


def init_mlp_params(key, input_size, num_of_actions, hidden=HIDDEN):
    # Mimic torch.nn.Linear default init: U(-1/sqrt(fan_in), 1/sqrt(fan_in)).
    k1, k2, k3, k4 = jax.random.split(key, 4)
    bound1 = 1.0 / (input_size ** 0.5)
    bound2 = 1.0 / (hidden ** 0.5)
    w1 = jax.random.uniform(k1, (input_size, hidden), jnp.float32, -bound1, bound1)
    b1 = jax.random.uniform(k2, (hidden,), jnp.float32, -bound1, bound1)
    w2 = jax.random.uniform(k3, (hidden, num_of_actions), jnp.float32, -bound2, bound2)
    b2 = jax.random.uniform(k4, (num_of_actions,), jnp.float32, -bound2, bound2)
    return w1, b1, w2, b2


def _ref_forward(state, w1, b1, w2, b2):
    return jnp.maximum(state @ w1 + b1, 0.0) @ w2 + b2


if __name__ == "__main__":
    key = jax.random.PRNGKey(0)
    input_size = 5        # sensor signals + orientation (self-driving-car DQN)
    num_of_actions = 3
    batch = 8

    pkey, xkey = jax.random.split(key)
    w1, b1, w2, b2 = init_mlp_params(pkey, input_size, num_of_actions)
    params = prepare_mlp_params(w1, b1, w2, b2)   # one-time, outside forward path
    state = jax.random.normal(xkey, (batch, input_size), jnp.float32)

    fwd = jax.jit(mlp_forward)

    q = jax.block_until_ready(fwd(state, params))
    ref = _ref_forward(state, w1, b1, w2, b2)
    assert q.shape == (batch, num_of_actions)
    assert jnp.allclose(q, ref, atol=1e-5, rtol=1e-5), float(jnp.max(jnp.abs(q - ref)))

    # Also exercise a multi-tile grid with a ragged last batch tile.
    big_state = jax.random.normal(jax.random.PRNGKey(1), (1024 + 17, input_size), jnp.float32)
    q_big = jax.block_until_ready(fwd(big_state, params))
    ref_big = _ref_forward(big_state, w1, b1, w2, b2)
    assert q_big.shape == (1024 + 17, num_of_actions)
    assert jnp.allclose(q_big, ref_big, atol=1e-4, rtol=1e-4)

    print("KERNEL_OK")
</pallas_src>

<mosaic_0001>
module attributes {stable_mosaic.version = 11 : i64} {
  func.func @mlp_kernel(%arg0: i32, %arg1: memref<8x5xf32, #tpu.memory_space<vmem>>, %arg2: memref<5x50xf32, #tpu.memory_space<vmem>>, %arg3: memref<1x50xf32, #tpu.memory_space<vmem>>, %arg4: memref<50x3xf32, #tpu.memory_space<vmem>>, %arg5: memref<1x3xf32, #tpu.memory_space<vmem>>, %arg6: memref<8x3xf32, #tpu.memory_space<vmem>>) attributes {dimension_semantics = [#tpu.dimension_semantics<parallel>], iteration_bounds = array<i64: 1>, scalar_prefetch = 0 : i64, scratch_operands = 0 : i64, tpu.core_type = #tpu.core_type<tc>, window_params = [{transform_indices = @transform_0, window_bounds = array<i64: 8, 5>}, {pipeline_mode = #tpu.pipeline_mode<synchronous>, transform_indices = @transform_1, window_bounds = array<i64: 5, 50>}, {pipeline_mode = #tpu.pipeline_mode<synchronous>, transform_indices = @transform_2, window_bounds = array<i64: 1, 50>}, {pipeline_mode = #tpu.pipeline_mode<synchronous>, transform_indices = @transform_3, window_bounds = array<i64: 50, 3>}, {pipeline_mode = #tpu.pipeline_mode<synchronous>, transform_indices = @transform_4, window_bounds = array<i64: 1, 3>}, {transform_indices = @transform_5, window_bounds = array<i64: 8, 3>}]} {
    %c0 = arith.constant 0 : index
    %c0_0 = arith.constant 0 : index
    %0 = vector.load %arg1[%c0, %c0_0] : memref<8x5xf32, #tpu.memory_space<vmem>>, vector<8x5xf32>
    %c0_1 = arith.constant 0 : index
    %c0_2 = arith.constant 0 : index
    %1 = vector.load %arg2[%c0_1, %c0_2] : memref<5x50xf32, #tpu.memory_space<vmem>>, vector<5x50xf32>
    %cst = arith.constant dense<0.000000e+00> : vector<8x50xf32>
    %2 = tpu.matmul %0, %1, %cst {dimension_numbers = #tpu.dot_dimension_numbers<[1], [0], [0], [1], [0, 0, 1, 1], [], []>} : vector<8x5xf32>, vector<5x50xf32>, vector<8x50xf32> -> vector<8x50xf32>
    %c0_3 = arith.constant 0 : index
    %c0_4 = arith.constant 0 : index
    %3 = vector.load %arg3[%c0_3, %c0_4] : memref<1x50xf32, #tpu.memory_space<vmem>>, vector<1x50xf32>
    %4 = vector.broadcast %3 : vector<1x50xf32> to vector<8x50xf32>
    %5 = arith.addf %2, %4 : vector<8x50xf32>
    %cst_5 = arith.constant 0.000000e+00 : f32
    %6 = vector.broadcast %cst_5 : f32 to vector<8x50xf32>
    %7 = arith.maximumf %5, %6 : vector<8x50xf32>
    %c0_6 = arith.constant 0 : index
    %c0_7 = arith.constant 0 : index
    %8 = vector.load %arg4[%c0_6, %c0_7] : memref<50x3xf32, #tpu.memory_space<vmem>>, vector<50x3xf32>
    %cst_8 = arith.constant dense<0.000000e+00> : vector<8x3xf32>
    %9 = tpu.matmul %7, %8, %cst_8 {dimension_numbers = #tpu.dot_dimension_numbers<[1], [0], [0], [1], [0, 0, 1, 1], [], []>} : vector<8x50xf32>, vector<50x3xf32>, vector<8x3xf32> -> vector<8x3xf32>
    %c0_9 = arith.constant 0 : index
    %c0_10 = arith.constant 0 : index
    %10 = vector.load %arg5[%c0_9, %c0_10] : memref<1x3xf32, #tpu.memory_space<vmem>>, vector<1x3xf32>
    %11 = vector.broadcast %10 : vector<1x3xf32> to vector<8x3xf32>
    %12 = arith.addf %9, %11 : vector<8x3xf32>
    %c0_11 = arith.constant 0 : index
    %c0_12 = arith.constant 0 : index
    %13 = vector.load %arg6[%c0_11, %c0_12] : memref<8x3xf32, #tpu.memory_space<vmem>>, vector<8x3xf32>
    tpu.vector_store %arg6[%c0_11, %c0_12], %12 {strides = array<i32>} : memref<8x3xf32, #tpu.memory_space<vmem>>, vector<8x3xf32>,
    return
  }
  func.func @transform_0(%arg0: i32) -> (i32, i32) {
    %c0_i32 = arith.constant 0 : i32
    %c0_i32_0 = arith.constant 0 : i32
    return %arg0, %c0_i32 : i32, i32
  }
  func.func @transform_1(%arg0: i32) -> (i32, i32) {
    %c0_i32 = arith.constant 0 : i32
    %c0_i32_0 = arith.constant 0 : i32
    %c0_i32_1 = arith.constant 0 : i32
    return %c0_i32, %c0_i32_0 : i32, i32
  }
  func.func @transform_2(%arg0: i32) -> (i32, i32) {
    %c0_i32 = arith.constant 0 : i32
    %c0_i32_0 = arith.constant 0 : i32
    %c0_i32_1 = arith.constant 0 : i32
    return %c0_i32, %c0_i32_0 : i32, i32
  }
  func.func @transform_3(%arg0: i32) -> (i32, i32) {
    %c0_i32 = arith.constant 0 : i32
    %c0_i32_0 = arith.constant 0 : i32
    %c0_i32_1 = arith.constant 0 : i32
    return %c0_i32, %c0_i32_0 : i32, i32
  }
  func.func @transform_4(%arg0: i32) -> (i32, i32) {
    %c0_i32 = arith.constant 0 : i32
    %c0_i32_0 = arith.constant 0 : i32
    %c0_i32_1 = arith.constant 0 : i32
    return %c0_i32, %c0_i32_0 : i32, i32
  }
  func.func @transform_5(%arg0: i32) -> (i32, i32) {
    %c0_i32 = arith.constant 0 : i32
    %c0_i32_0 = arith.constant 0 : i32
    return %arg0, %c0_i32 : i32, i32
  }
}

</mosaic_0001>

<llo_original>
// kernel: mlp_forward.1
$region0: #{mlp_forward.1}
  #allocation0 [shape = 'u32[]', space=smem, size = 0x4, offset = 0x4, fixed_abs, tag = 'smem constant byte address 0x4 - core index']
  #allocation1 [shape = 'u32[72,128]{1,0:T(1,128)}', space=vmem, size = 0x9000, scoped, tag = 'internal scratch']
  %s0 = inlined_call_operand.vmem [shape: f32[8,5], index: 0, kind: input, shape index: {}]
  %s1 = inlined_call_operand.vmem [shape: f32[5,50], index: 1, kind: input, shape index: {}]
  %s2 = inlined_call_operand.vmem [shape: f32[1,50], index: 2, kind: input, shape index: {}]
  %s3 = inlined_call_operand.vmem [shape: f32[50,3], index: 3, kind: input, shape index: {}]
  %s4 = inlined_call_operand.vmem [shape: f32[1,3], index: 4, kind: input, shape index: {}]
  %s5 = inlined_call_operand.vmem [shape: f32[8,3], index: 5, kind: output, shape index: {}]
  %s6 = sld [smem:[#allocation0]]
  $region30: #{mlp_forward.1} parent=0
    _
  %s8 = ssub.s32 1, %s6
  %s9 = scalar_select 0, %s8, %s6
  // Predicated region
  $region2: #{mlp_forward.1} parent=0 // pred_check
    _
  $region3: #{mlp_forward.1} parent=0 // pred_check_branch
    %11 = sbr.rel (0) target = $region5
  $region4: #{mlp_forward.1} parent=0 // pred_region
    _
  $region5: #{mlp_forward.1} parent=0 // pred_fallthru
    _
  // Predicated region
  $region6: #{mlp_forward.1} parent=0 // pred_check
    _
  $region7: #{mlp_forward.1} parent=0 // pred_check_branch
    %13 = sbr.rel (0) target = $region9
  $region8: #{mlp_forward.1} parent=0 // pred_region
    _
  $region9: #{mlp_forward.1} parent=0 // pred_fallthru
    _
  // Predicated region
  $region10: #{mlp_forward.1} parent=0 // pred_check
    _
  $region11: #{mlp_forward.1} parent=0 // pred_check_branch
    %15 = sbr.rel (0) target = $region13
  $region12: #{mlp_forward.1} parent=0 // pred_region
    _
  $region13: #{mlp_forward.1} parent=0 // pred_fallthru
    _
  // Predicated region
  $region14: #{mlp_forward.1} parent=0 // pred_check
    _
  $region15: #{mlp_forward.1} parent=0 // pred_check_branch
    %17 = sbr.rel (0) target = $region17
  $region16: #{mlp_forward.1} parent=0 // pred_region
    _
  $region17: #{mlp_forward.1} parent=0 // pred_fallthru
    _
  // Predicated region
  $region18: #{mlp_forward.1} parent=0 // pred_check
    _
  $region19: #{mlp_forward.1} parent=0 // pred_check_branch
    %19 = sbr.rel (0) target = $region21
  $region20: #{mlp_forward.1} parent=0 // pred_region
    _
  $region21: #{mlp_forward.1} parent=0 // pred_fallthru
    _
  %v20 = vld [vmem:[%s0] sm:$0xff]
  %v21 = vld [vmem:[%s1] sm:$0x1f]
  %v22 = vld [vmem:[%s2] sm:$0x1]
  %v24 = vperm.slane %v22, 0
  %vm26 = vcmask 39936
  %v28 = vsel %vm26, %v20, 0
  %vm30 = vcmask 1044480
  %v32 = vsel %vm30, %v21, 0
  %34 = vmatpush.msra.mxu0 0.0
  %35 = vmatpush.msra.mxu0 0.0
  %36 = vmatpush.msra.mxu0 0.0
  %37 = vmatpush.msra.mxu0 0.0
  %38 = vmatpush.msra.mxu0 0.0
  %39 = vmatpush.msra.mxu0 0.0
  %40 = vmatpush.msra.mxu0 0.0
  %41 = vmatpush.msra.mxu0 0.0
  %42 = vmatpush.msra.mxu0 0.0
  %43 = vmatpush.msra.mxu0 0.0
  %44 = vmatpush.msra.mxu0 0.0
  %45 = vmatpush.msra.mxu0 0.0
  %46 = vmatpush.msra.mxu0 0.0
  %47 = vmatpush.msra.mxu0 0.0
  %48 = vmatpush.msra.mxu0 0.0
  %49 = vmatpush.msra.mxu0 %v32
  %50 = vmatmul.f32.gmra.mxu0 %v28
  %v51 = vpop.f32.mrf.mxu0
  %v52 = vadd.f32 %v24, %v51
  %53 = vdwg.mxu0
  %v54 = vmax.f32 %v52, 0.0
  %v55 = vld [vmem:[%s3] sm:$0xff]
  %v56 = vld [vmem:[%s3 + $0x8] sm:$0xff]
  %v57 = vld [vmem:[%s3 + $0x10] sm:$0xff]
  %v58 = vld [vmem:[%s3 + $0x18] sm:$0xff]
  %v59 = vld [vmem:[%s3 + $0x20] sm:$0xff]
  %v60 = vld [vmem:[%s3 + $0x28] sm:$0xff]
  %v61 = vld [vmem:[%s3 + $0x30] sm:$0x3]
  %v62 = vld [vmem:[%s4] sm:$0x1]
  %v64 = vperm.slane %v62, 0
  %vm66 = vcmask 408576
  %v68 = vsel %vm66, %v54, 0
  %vm70 = vcmask 1041408
  %v72 = vsel %vm70, %v61, 0
  %74 = vmatpush.msra.mxu0 0.0
  %75 = vmatpush.msra.mxu0 0.0
  %76 = vmatpush.msra.mxu0 0.0
  %77 = vmatpush.msra.mxu0 0.0
  %78 = vmatpush.msra.mxu0 0.0
  %79 = vmatpush.msra.mxu0 0.0
  %80 = vmatpush.msra.mxu0 0.0
  %81 = vmatpush.msra.mxu0 0.0
  %82 = vmatpush.msra.mxu0 0.0
  %83 = vmatpush.msra.mxu0 %v72
  %84 = vmatpush.msra.mxu0 %v60
  %85 = vmatpush.msra.mxu0 %v59
  %86 = vmatpush.msra.mxu0 %v58
  %87 = vmatpush.msra.mxu0 %v57
  %88 = vmatpush.msra.mxu0 %v56
  %89 = vmatpush.msra.mxu0 %v55
  %90 = vmatmul.f32.gmra.mxu0 %v68
  %v91 = vpop.f32.mrf.mxu0
  %v92 = vadd.f32 %v64, %v91
  %93 = vdwg.mxu0
  %vm94 = vcmask 23552
  %95 = vst.msk [vmem:[%s5] sm:$0xff] %vm94, %v92
  // Predicated region
  $region22: #{mlp_forward.1} parent=0 // pred_check
    _
  $region23: #{mlp_forward.1} parent=0 // pred_check_branch
    %97 = sbr.rel (0) target = $region25
  $region24: #{mlp_forward.1} parent=0 // pred_region
    _
  $region25: #{mlp_forward.1} parent=0 // pred_fallthru
    _
  // Predicated region
  $region26: #{mlp_forward.1} parent=0 // pred_check
    _
  $region27: #{mlp_forward.1} parent=0 // pred_check_branch
    %99 = sbr.rel (0) target = $region29
  $region28: #{mlp_forward.1} parent=0 // pred_region
    _
  $region29: #{mlp_forward.1} parent=0 // pred_fallthru
    _

</llo_original>
